<compile_context>
chip_gen: v7x
topology: tpu7x:2x2x1
jax: 0.10.0
libtpu: 0.0.40
codegen_flags: <defaults>
</compile_context>

<pallas_src>
import numpy as np
import jax
import jax.numpy as jnp
from jax.experimental import pallas as pl
from jax.experimental.pallas import tpu as pltpu


def _make_clustering_loss_kernel(ncrops, out_dim, inv_student_temp, inv_batch):
    V = int(ncrops)
    D = int(out_dim)
    inv_student_temp = float(inv_student_temp)
    inv_batch = float(inv_batch)

    def kernel(inv_temp_ref, student_ref, teacher_ref, center_ref,
               loss_ref, tsum_ref):
        inv_temp = inv_temp_ref[0, 0]                       # 1 / teacher_temp (SMEM)

        # Upcast right after the DMA; all math stays f32 (v5e has no bf16
        # VPU/EUP path).  For f32 inputs these casts are no-ops.
        teacher = teacher_ref[...].astype(jnp.float32)      # (2, tb, D)
        student = student_ref[...].astype(jnp.float32)      # (V, tb, D)
        center = center_ref[...].astype(jnp.float32)        # (1, D) -> broadcasts

        # ---- teacher softmax over D (multiplies, no divides) -------------
        t = (teacher - center) * inv_temp
        t = t - jnp.max(t, axis=-1, keepdims=True)
        te = jnp.exp(t)
        denom = jnp.sum(te, axis=-1, keepdims=True)         # (2, tb, 1)
        q = te * pl.reciprocal(denom, approx=True)          # (2, tb, D)
        qsum = jnp.sum(q, axis=-1)                          # (2, tb)  (~1.0)

        # ---- student log-sum-exp (log-softmax never materialized) --------
        s = student * inv_student_temp                      # (V, tb, D)
        s_max = jnp.max(s, axis=-1, keepdims=True)          # (V, tb, 1)
        sum_exp = jnp.sum(jnp.exp(s - s_max), axis=-1)      # (V, tb)
        lse = s_max[..., 0] + jnp.log(sum_exp)              # (V, tb)

        # ---- cross-entropy partials ---------------------------------------
        #   ce[iq, v] = sum_{b,d} q[iq,b,d]*s[v,b,d] - sum_b qsum[iq,b]*lse[v,b]
        # computed per teacher chunk (only 2) against the resident student
        # tile; no (2, V, tb, D) intermediate is ever materialized.
        qs_rows = []
        for iq in range(2):
            prod = q[iq] * s                                 # (V, tb, D)
            qs_rows.append(jnp.sum(jnp.sum(prod, axis=-1), axis=-1))  # (V,)
        qs_mat = jnp.stack(qs_rows, axis=0)                  # (2, V)
        q_lse = jnp.sum(qsum[:, None, :] * lse[None, :, :], axis=-1)  # (2, V)
        ce = qs_mat - q_lse                                  # (2, V)
        loss_ref[...] = (-ce * inv_batch).reshape(1, 2, V)

        # ---- teacher-sum partial for the EMA center update -----------------
        tsum = jnp.sum(jnp.sum(teacher, axis=0), axis=0)     # (D,)
        tsum_ref[...] = tsum.reshape(1, 1, D)

    return kernel


class ClusteringLossPallas:
    """JAX/Pallas port of the PyTorch ClusteringLoss module."""

    def __init__(self, out_dim, ncrops, warmup_teacher_temp, teacher_temp,
                 warmup_teacher_temp_epochs, nepochs,
                 student_temp=0.1, center_momentum=0.9,
                 vmem_budget_bytes=40 * 1024 * 1024):
        self.student_temp = float(student_temp)
        self.center_momentum = float(center_momentum)
        self.ncrops = int(ncrops)
        self.out_dim = int(out_dim)
        self.vmem_budget_bytes = int(vmem_budget_bytes)
        # buffer 'center' initialised to zeros, just like register_buffer.
        self.center = jnp.zeros((1, out_dim), jnp.float32)
        self.teacher_temp_schedule = np.concatenate((
            np.linspace(warmup_teacher_temp, teacher_temp, warmup_teacher_temp_epochs),
            np.ones(nepochs - warmup_teacher_temp_epochs) * teacher_temp,
        )).astype(np.float32)

    def _choose_tile_b(self, B, D, itemsize):
        """Largest batch tile (multiple of the sublane minimum, divides B)
        whose double-buffered inputs + f32 working set fit the VMEM budget."""
        V = self.ncrops
        sublane = 16 if itemsize == 2 else 8          # bf16 min tile is (16, 128)
        # double-buffered native-dtype input blocks + ~3 f32 full-size temps
        per_row = (V + 2) * D * (2 * itemsize + 3 * 4)
        candidates = [tb for tb in range(sublane, B + 1, sublane) if B % tb == 0]
        if not candidates:
            return B                                   # tiny batch: full-extent block
        fitting = [tb for tb in candidates if tb * per_row <= self.vmem_budget_bytes]
        return max(fitting) if fitting else min(candidates)

    def __call__(self, student_output, teacher_output, epoch):
        n_s, D = student_output.shape
        n_t, _ = teacher_output.shape
        assert D == self.out_dim
        B = n_t // 2
        V = self.ncrops
        assert n_s == V * B and n_t == 2 * B

        itemsize = jnp.dtype(student_output.dtype).itemsize
        tb = self._choose_tile_b(B, D, itemsize)
        num_tiles = B // tb

        temp = float(self.teacher_temp_schedule[epoch])
        inv_temp = jnp.full((1, 1), 1.0 / temp, jnp.float32)

        # Free, view-like reshapes: crop / teacher chunks become a leading axis
        # so the batch dimension can be tiled by the grid.  No dtype cast here:
        # the kernel DMAs the native dtype and upcasts on-chip.
        student3 = student_output.reshape(V, B, D)
        teacher3 = teacher_output.reshape(2, B, D)

        kernel = _make_clustering_loss_kernel(V, D, 1.0 / self.student_temp, 1.0 / B)

        cost = pl.CostEstimate(
            flops=int((V + 2) * B * D * 8 + 4 * V * B * D),
            transcendentals=int((V + 2) * B * D),
            bytes_accessed=int((V + 2) * B * D * itemsize + 2 * D * 4
                               + num_tiles * (2 * V + D) * 4),
        )

        loss_parts, tsum_parts = pl.pallas_call(
            kernel,
            out_shape=(
                jax.ShapeDtypeStruct((num_tiles, 2, V), jnp.float32),
                jax.ShapeDtypeStruct((num_tiles, 1, D), jnp.float32),
            ),
            grid=(num_tiles,),
            in_specs=[
                pl.BlockSpec((1, 1), lambda i: (0, 0),
                             memory_space=pltpu.MemorySpace.SMEM),   # 1/teacher_temp
                pl.BlockSpec((V, tb, D), lambda i: (0, i, 0)),        # student tile
                pl.BlockSpec((2, tb, D), lambda i: (0, i, 0)),        # teacher tile
                pl.BlockSpec((1, D), lambda i: (0, 0)),               # center
            ],
            out_specs=(
                pl.BlockSpec((1, 2, V), lambda i: (i, 0, 0)),         # loss partials
                pl.BlockSpec((1, 1, D), lambda i: (i, 0, 0)),         # teacher-sum partials
            ),
            compiler_params=pltpu.CompilerParams(
                dimension_semantics=("parallel",),        # independent per-tile partials
                vmem_limit_bytes=48 * 1024 * 1024,        # explicit: v7x has 64 MiB/TC
            ),
            cost_estimate=cost,
        )(inv_temp, student3, teacher3, self.center)

        # ---- tiny reductions over the per-tile partials (wrapper-side) ----
        loss_pairs = jnp.sum(loss_parts, axis=0)                       # (2, V)
        batch_center = jnp.sum(tsum_parts, axis=0) / float(2 * B)      # (1, D)
        # TODO(synk): under multi-device data parallelism, all-reduce
        # batch_center (jax.lax.psum) to match DINO's dist.all_reduce.
        self.center = (self.center * self.center_momentum
                       + batch_center * (1.0 - self.center_momentum))

        # Glue: drop diagonal v == iq, average large (v < 2) / small (v >= 2) terms.
        iq_idx = np.arange(2)[:, None]
        v_idx = np.arange(V)[None, :]
        skip = v_idx == iq_idx
        large_mask = (v_idx < 2) & ~skip
        small_mask = (v_idx >= 2) & ~skip
        n_large = int(large_mask.sum())
        n_small = int(small_mask.sum())
        loss_large = jnp.sum(jnp.where(jnp.asarray(large_mask), loss_pairs, 0.0)) / n_large
        if n_small > 0:
            loss_small = jnp.sum(jnp.where(jnp.asarray(small_mask), loss_pairs, 0.0)) / n_small
            total_loss = 0.5 * (loss_large + loss_small)
        else:
            # ncrops == 2: no small-crop terms (reference would divide by zero).
            total_loss = loss_large
        return total_loss


def _reference_loss(student, teacher, center, teacher_temp, student_temp,
                    ncrops, center_momentum):
    """Pure-JAX reference mirroring the PyTorch forward, for verification."""
    s = student / student_temp
    s_chunks = jnp.split(s, ncrops, axis=0)
    q_all = jax.nn.softmax((teacher - center) / teacher_temp, axis=-1)
    q_chunks = jnp.split(q_all, 2, axis=0)

    loss_large, loss_small = 0.0, 0.0
    n_large, n_small = 0, 0
    for iq, q in enumerate(q_chunks):
        for v in range(ncrops):
            if v == iq:
                continue
            loss = jnp.mean(jnp.sum(-q * jax.nn.log_softmax(s_chunks[v], axis=-1), axis=-1))
            if v < 2:
                loss_large += loss
                n_large += 1
            else:
                loss_small += loss
                n_small += 1
    total = 0.5 * (loss_large / n_large + loss_small / n_small)
    new_center = (center * center_momentum
                  + jnp.mean(teacher, axis=0, keepdims=True) * (1 - center_momentum))
    return total, new_center


if __name__ == "__main__":
    # Small, deterministic example shapes.
    out_dim = 128
    ncrops = 8          # 2 large crops + 6 small crops
    batch = 16
    nepochs = 10
    warmup_epochs = 3
    epoch = 2

    loss_mod = ClusteringLossPallas(
        out_dim=out_dim, ncrops=ncrops,
        warmup_teacher_temp=0.04, teacher_temp=0.07,
        warmup_teacher_temp_epochs=warmup_epochs, nepochs=nepochs,
        student_temp=0.1, center_momentum=0.9,
        # Tiny budget on purpose so the toy shape still exercises the
        # multi-tile (grid > 1, per-tile partials) path.
        vmem_budget_bytes=256 * 1024)

    key = jax.random.PRNGKey(0)
    k1, k2 = jax.random.split(key)
    student_output = jax.random.normal(k1, (ncrops * batch, out_dim), jnp.float32)
    teacher_output = jax.random.normal(k2, (2 * batch, out_dim), jnp.float32)

    total_loss = loss_mod(student_output, teacher_output, epoch)
    total_loss = jax.block_until_ready(total_loss)
    new_center = jax.block_until_ready(loss_mod.center)

    # Verify against pure-JAX reference (looser loss tol: approx reciprocal
    # is used for the teacher-softmax denominator).
    ref_loss, ref_center = _reference_loss(
        student_output, teacher_output, jnp.zeros((1, out_dim), jnp.float32),
        float(loss_mod.teacher_temp_schedule[epoch]), 0.1, ncrops, 0.9)
    assert np.allclose(np.asarray(total_loss), np.asarray(ref_loss),
                       rtol=1e-2, atol=1e-2), (float(total_loss), float(ref_loss))
    assert np.allclose(np.asarray(new_center), np.asarray(ref_center),
                       rtol=1e-5, atol=1e-6)

    print("KERNEL_OK")
</pallas_src>

<mosaic_0001>
module attributes {stable_mosaic.version = 11 : i64} {
  func.func @kernel(%arg0: i32, %arg1: memref<1x1xf32, #tpu.memory_space<smem>>, %arg2: memref<8x8x128xf32, #tpu.memory_space<vmem>>, %arg3: memref<2x8x128xf32, #tpu.memory_space<vmem>>, %arg4: memref<1x128xf32, #tpu.memory_space<vmem>>, %arg5: memref<1x2x8xf32, #tpu.memory_space<vmem>>, %arg6: memref<1x1x128xf32, #tpu.memory_space<vmem>>) attributes {dimension_semantics = [#tpu.dimension_semantics<parallel>], iteration_bounds = array<i64: 2>, scalar_prefetch = 0 : i64, scratch_operands = 0 : i64, tpu.core_type = #tpu.core_type<tc>, window_params = [{transform_indices = @transform_0, window_bounds = array<i64: 1, 1>}, {transform_indices = @transform_1, window_bounds = array<i64: 8, 8, 128>}, {transform_indices = @transform_2, window_bounds = array<i64: 2, 8, 128>}, {pipeline_mode = #tpu.pipeline_mode<synchronous>, transform_indices = @transform_3, window_bounds = array<i64: 1, 128>}, {transform_indices = @transform_4, window_bounds = array<i64: 1, 2, 8>}, {transform_indices = @transform_5, window_bounds = array<i64: 1, 1, 128>}]} {
    %c0 = arith.constant 0 : index
    %c0_0 = arith.constant 0 : index
    %0 = memref.load %arg1[%c0, %c0_0] : memref<1x1xf32, #tpu.memory_space<smem>>
    %c0_1 = arith.constant 0 : index
    %c0_2 = arith.constant 0 : index
    %c0_3 = arith.constant 0 : index
    %1 = vector.load %arg3[%c0_1, %c0_2, %c0_3] : memref<2x8x128xf32, #tpu.memory_space<vmem>>, vector<2x8x128xf32>
    %c0_4 = arith.constant 0 : index
    %c0_5 = arith.constant 0 : index
    %c0_6 = arith.constant 0 : index
    %2 = vector.load %arg2[%c0_4, %c0_5, %c0_6] : memref<8x8x128xf32, #tpu.memory_space<vmem>>, vector<8x8x128xf32>
    %c0_7 = arith.constant 0 : index
    %c0_8 = arith.constant 0 : index
    %3 = vector.load %arg4[%c0_7, %c0_8] : memref<1x128xf32, #tpu.memory_space<vmem>>, vector<1x128xf32>
    %4 = vector.shape_cast %3 : vector<1x128xf32> to vector<1x1x128xf32>
    %5 = vector.broadcast %4 : vector<1x1x128xf32> to vector<2x8x128xf32>
    %6 = arith.subf %1, %5 : vector<2x8x128xf32>
    %7 = vector.broadcast %0 : f32 to vector<2x8x128xf32>
    %8 = arith.mulf %6, %7 : vector<2x8x128xf32>
    %cst = arith.constant dense<0xFF800000> : vector<2x8xf32>
    %9 = vector.multi_reduction <maximumf>, %8, %cst [2] : vector<2x8x128xf32> to vector<2x8xf32>
    %10 = vector.shape_cast %9 : vector<2x8xf32> to vector<2x8x1xf32>
    %11 = vector.broadcast %10 : vector<2x8x1xf32> to vector<2x8x128xf32>
    %12 = arith.subf %8, %11 : vector<2x8x128xf32>
    %13 = math.exp %12 : vector<2x8x128xf32>
    %cst_9 = arith.constant dense<0.000000e+00> : vector<2x8xf32>
    %14 = vector.multi_reduction <add>, %13, %cst_9 [2] : vector<2x8x128xf32> to vector<2x8xf32>
    %15 = vector.shape_cast %14 : vector<2x8xf32> to vector<2x8x1xf32>
    %16 = tpu.reciprocal %15 {approx = true} : vector<2x8x1xf32> -> vector<2x8x1xf32>
    %17 = vector.broadcast %16 : vector<2x8x1xf32> to vector<2x8x128xf32>
    %18 = arith.mulf %13, %17 : vector<2x8x128xf32>
    %cst_10 = arith.constant dense<0.000000e+00> : vector<2x8xf32>
    %19 = vector.multi_reduction <add>, %18, %cst_10 [2] : vector<2x8x128xf32> to vector<2x8xf32>
    %cst_11 = arith.constant 1.000000e+01 : f32
    %20 = vector.broadcast %cst_11 : f32 to vector<8x8x128xf32>
    %21 = arith.mulf %2, %20 : vector<8x8x128xf32>
    %cst_12 = arith.constant dense<0xFF800000> : vector<8x8xf32>
    %22 = vector.multi_reduction <maximumf>, %21, %cst_12 [2] : vector<8x8x128xf32> to vector<8x8xf32>
    %23 = vector.shape_cast %22 : vector<8x8xf32> to vector<8x8x1xf32>
    %24 = vector.broadcast %23 : vector<8x8x1xf32> to vector<8x8x128xf32>
    %25 = arith.subf %21, %24 : vector<8x8x128xf32>
    %26 = math.exp %25 : vector<8x8x128xf32>
    %cst_13 = arith.constant dense<0.000000e+00> : vector<8x8xf32>
    %27 = vector.multi_reduction <add>, %26, %cst_13 [2] : vector<8x8x128xf32> to vector<8x8xf32>
    %28 = vector.shape_cast %23 : vector<8x8x1xf32> to vector<8x8xf32>
    %29 = math.log %27 : vector<8x8xf32>
    %30 = arith.addf %28, %29 : vector<8x8xf32>
    %31 = vector.extract_strided_slice %18 {offsets = [0, 0, 0], sizes = [1, 8, 128], strides = [1, 1, 1]} : vector<2x8x128xf32> to vector<1x8x128xf32>
    %32 = vector.shape_cast %31 : vector<1x8x128xf32> to vector<8x128xf32>
    %33 = vector.shape_cast %32 : vector<8x128xf32> to vector<1x8x128xf32>
    %34 = vector.broadcast %33 : vector<1x8x128xf32> to vector<8x8x128xf32>
    %35 = arith.mulf %34, %21 : vector<8x8x128xf32>
    %cst_14 = arith.constant dense<0.000000e+00> : vector<8x8xf32>
    %36 = vector.multi_reduction <add>, %35, %cst_14 [2] : vector<8x8x128xf32> to vector<8x8xf32>
    %cst_15 = arith.constant dense<0.000000e+00> : vector<8xf32>
    %37 = vector.multi_reduction <add>, %36, %cst_15 [1] : vector<8x8xf32> to vector<8xf32>
    %38 = vector.extract_strided_slice %18 {offsets = [1, 0, 0], sizes = [1, 8, 128], strides = [1, 1, 1]} : vector<2x8x128xf32> to vector<1x8x128xf32>
    %39 = vector.shape_cast %38 : vector<1x8x128xf32> to vector<8x128xf32>
    %40 = vector.shape_cast %39 : vector<8x128xf32> to vector<1x8x128xf32>
    %41 = vector.broadcast %40 : vector<1x8x128xf32> to vector<8x8x128xf32>
    %42 = arith.mulf %41, %21 : vector<8x8x128xf32>
    %cst_16 = arith.constant dense<0.000000e+00> : vector<8x8xf32>
    %43 = vector.multi_reduction <add>, %42, %cst_16 [2] : vector<8x8x128xf32> to vector<8x8xf32>
    %cst_17 = arith.constant dense<0.000000e+00> : vector<8xf32>
    %44 = vector.multi_reduction <add>, %43, %cst_17 [1] : vector<8x8xf32> to vector<8xf32>
    %45 = vector.shape_cast %37 : vector<8xf32> to vector<1x8xf32>
    %46 = vector.shape_cast %44 : vector<8xf32> to vector<1x8xf32>
    %47 = tpu.concatenate %45, %46 in 0 : vector<1x8xf32>, vector<1x8xf32> -> vector<2x8xf32>
    %48 = vector.shape_cast %19 : vector<2x8xf32> to vector<2x1x8xf32>
    %49 = vector.shape_cast %30 : vector<8x8xf32> to vector<1x8x8xf32>
    %50 = vector.broadcast %48 : vector<2x1x8xf32> to vector<2x8x8xf32>
    %51 = vector.broadcast %49 : vector<1x8x8xf32> to vector<2x8x8xf32>
    %52 = arith.mulf %50, %51 : vector<2x8x8xf32>
    %cst_18 = arith.constant dense<0.000000e+00> : vector<2x8xf32>
    %53 = vector.multi_reduction <add>, %52, %cst_18 [2] : vector<2x8x8xf32> to vector<2x8xf32>
    %54 = arith.subf %47, %53 : vector<2x8xf32>
    %cst_19 = arith.constant 0.000000e+00 : f32
    %55 = vector.broadcast %cst_19 : f32 to vector<2x8xf32>
    %56 = arith.subf %55, %54 : vector<2x8xf32>
    %cst_20 = arith.constant 6.250000e-02 : f32
    %57 = vector.broadcast %cst_20 : f32 to vector<2x8xf32>
    %58 = arith.mulf %56, %57 : vector<2x8xf32>
    %59 = vector.shape_cast %58 : vector<2x8xf32> to vector<1x2x8xf32>
    %c0_21 = arith.constant 0 : index
    %c0_22 = arith.constant 0 : index
    %c0_23 = arith.constant 0 : index
    %60 = vector.load %arg5[%c0_21, %c0_22, %c0_23] : memref<1x2x8xf32, #tpu.memory_space<vmem>>, vector<1x2x8xf32>
    tpu.vector_store %arg5[%c0_21, %c0_22, %c0_23], %59 {strides = array<i32>} : memref<1x2x8xf32, #tpu.memory_space<vmem>>, vector<1x2x8xf32>,
    %cst_24 = arith.constant dense<0.000000e+00> : vector<8x128xf32>
    %61 = vector.multi_reduction <add>, %1, %cst_24 [0] : vector<2x8x128xf32> to vector<8x128xf32>
    %cst_25 = arith.constant dense<0.000000e+00> : vector<128xf32>
    %62 = vector.multi_reduction <add>, %61, %cst_25 [0] : vector<8x128xf32> to vector<128xf32>
    %63 = vector.shape_cast %62 : vector<128xf32> to vector<1x1x128xf32>
    %c0_26 = arith.constant 0 : index
    %c0_27 = arith.constant 0 : index
    %c0_28 = arith.constant 0 : index
    %64 = vector.load %arg6[%c0_26, %c0_27, %c0_28] : memref<1x1x128xf32, #tpu.memory_space<vmem>>, vector<1x1x128xf32>
    tpu.vector_store %arg6[%c0_26, %c0_27, %c0_28], %63 {strides = array<i32>} : memref<1x1x128xf32, #tpu.memory_space<vmem>>, vector<1x1x128xf32>,
    return
  }
  func.func @transform_0(%arg0: i32) -> (i32, i32) {
    %c0_i32 = arith.constant 0 : i32
    %c0_i32_0 = arith.constant 0 : i32
    %c0_i32_1 = arith.constant 0 : i32
    return %c0_i32, %c0_i32_0 : i32, i32
  }
  func.func @transform_1(%arg0: i32) -> (i32, i32, i32) {
    %c0_i32 = arith.constant 0 : i32
    %c0_i32_0 = arith.constant 0 : i32
    %c0_i32_1 = arith.constant 0 : i32
    return %c0_i32, %arg0, %c0_i32_0 : i32, i32, i32
  }
  func.func @transform_2(%arg0: i32) -> (i32, i32, i32) {
    %c0_i32 = arith.constant 0 : i32
    %c0_i32_0 = arith.constant 0 : i32
    %c0_i32_1 = arith.constant 0 : i32
    return %c0_i32, %arg0, %c0_i32_0 : i32, i32, i32
  }
  func.func @transform_3(%arg0: i32) -> (i32, i32) {
    %c0_i32 = arith.constant 0 : i32
    %c0_i32_0 = arith.constant 0 : i32
    %c0_i32_1 = arith.constant 0 : i32
    return %c0_i32, %c0_i32_0 : i32, i32
  }
  func.func @transform_4(%arg0: i32) -> (i32, i32, i32) {
    %c0_i32 = arith.constant 0 : i32
    %c0_i32_0 = arith.constant 0 : i32
    %c0_i32_1 = arith.constant 0 : i32
    return %arg0, %c0_i32, %c0_i32_0 : i32, i32, i32
  }
  func.func @transform_5(%arg0: i32) -> (i32, i32, i32) {
    %c0_i32 = arith.constant 0 : i32
    %c0_i32_0 = arith.constant 0 : i32
    %c0_i32_1 = arith.constant 0 : i32
    return %arg0, %c0_i32, %c0_i32_0 : i32, i32, i32
  }
}

</mosaic_0001>

<llo_original>
// kernel: tpu_custom_call.1
$region0: #{tpu_custom_call.1}
  #allocation0 [shape = 'u32[]', space=smem, size = 0x4, offset = 0x4, fixed_abs, tag = 'smem constant byte address 0x4 - core index']
  #allocation1 [shape = 'u32[144,128]{1,0:T(1,128)}', space=vmem, size = 0x12000, scoped, tag = 'internal scratch']
  #allocation2 [shape = 'f32[1,1]{1,0:T(1,128)S(6)}', space=smem, size = 0x200, scoped, tag = 'scoped memory for tpu_custom_call.1']
  %s0 = inlined_call_operand.<no memory space> [shape: f32[1,1], index: 0, kind: input, shape index: {}]
  %s1 = inlined_call_operand.hbm [shape: f32[8,16,128], index: 1, kind: input, shape index: {}]
  %s2 = inlined_call_operand.hbm [shape: f32[2,16,128], index: 2, kind: input, shape index: {}]
  %s3 = inlined_call_operand.vmem [shape: f32[1,128], index: 3, kind: input, shape index: {}]
  %s4 = inlined_call_operand.hbm [shape: f32[2,2,8], index: 4, kind: output, shape index: {0}]
  %s5 = inlined_call_operand.hbm [shape: f32[2,1,128], index: 5, kind: output, shape index: {1}]
  %6 = xla_tuple %s4, %s5
  %s7 = sld [smem:[#allocation0]]
  $region65: #{tpu_custom_call.1} parent=0
    _
  %s9 = ssub.s32 1, %s7
  %s10 = scalar_select 0, %s9, %s7
  %11 = sst [smem:[#allocation2]] %s0
  $region1: #{tpu_custom_call.1} parent=0
    #allocation3 [shape = 'u8[65536]{0}', space=vmem, size = 0x10000, scoped, tag = 'input window, operand 1']
    #allocation4 [shape = 's32[2]{0}', space=sflag, size = 0x8, scoped, tag = 'scoped memory for tpu_custom_call.1']
    #allocation5 [shape = 's32[2]{0}', space=sflag, size = 0x8, scoped, tag = 'scoped memory for tpu_custom_call.1']
    #allocation6 [shape = 'u8[16384]{0}', space=vmem, size = 0x4000, scoped, tag = 'input window, operand 2']
    #allocation7 [shape = 's32[2]{0}', space=sflag, size = 0x8, scoped, tag = 'scoped memory for tpu_custom_call.1']
    #allocation8 [shape = 'u8[2048]{0}', space=vmem, size = 0x800, scoped, tag = 'output window, operand 0']
    #allocation9 [shape = 'u8[1024]{0}', space=vmem, size = 0x400, scoped, tag = 'output window, operand 1']
    #allocation10 [shape = 's32[2]{0}', space=sflag, size = 0x8, scoped, tag = 'scoped memory for tpu_custom_call.1']
    %12 = vsyncpa [#allocation4], 0
    %s13 = scalar_lea.sflag [#allocation4], 1
    %14 = vsyncpa %s13, 0
    %15 = vsyncpa [#allocation7], 0
    %s16 = scalar_lea.sflag [#allocation7], 1
    %17 = vsyncpa %s16, 0
    %18 = vsyncpa [#allocation5], 0
    %s19 = scalar_lea.sflag [#allocation5], 1
    %20 = vsyncpa %s19, 0
    %21 = vsyncpa [#allocation10], 0
    %s22 = scalar_lea.sflag [#allocation10], 1
    %23 = vsyncpa %s22, 0
    loop: start=0, step=1, limit=4
    $region2: #{tpu_custom_call.1} parent=1 // loop_pre_header
      _
    $region3: #{tpu_custom_call.1} parent=1 // loop_header
      %s25 = sphi 0, %s29
      %p26 = scmp.ge.s32.totalorder %s25, 4
      %s33 = sphi 0, %s33
      %s35 = sphi 0, %s33
      %s36 = sphi 0, %s35
      %s50 = sphi 0, %s36
      %s56 = sphi 0, %s58
      %s59 = sphi 0, %s56
      %s60 = sphi 0, %s59
      %s76 = sphi 0, %s60
      %s82 = sphi 0, %s84
      %s85 = sphi 0, %s82
      %s86 = sphi 0, %s85
      %s102 = sphi 0, %s86
      %s106 = sphi 0, %s106
      %s108 = sphi 0, %s106
      %s109 = sphi 0, %s108
      %s123 = sphi 0, %s109
      %s129 = sphi 0, %s131
      %s132 = sphi 0, %s129
      %s133 = sphi 0, %s132
      %s149 = sphi 0, %s133
      %s155 = sphi 0, %s157
      %s158 = sphi 0, %s155
      %s159 = sphi 0, %s158
      %s175 = sphi 0, %s159
    $region4: #{tpu_custom_call.1} parent=1 // loop_header_branch
      %28 = sbr.rel (%p26) target = $region8
    $region5: #{tpu_custom_call.1} parent=1 // loop_body
      %s30 = ssub.s32 %s25, 1
      %s31 = ssub.s32 %s25, 2
      %s32 = sadd.s32 %s25, 1
      %s34 = sadd.s32 %s33, 1
      %p37 = scmp.eq.s32.totalorder %s25, 1
      %p38 = scmp.ne.s32.totalorder %s33, %s35
      %p39 = scmp.eq.s32.totalorder %s25, 0
      %p40 = por %p38, %p39
      %p41 = scmp.ne.s32.totalorder %s33, %s35
      %p42 = scmp.eq.s32.totalorder %s30, 1
      %p43 = por %p41, %p42
      %p44 = scmp.ne.s32.totalorder %s35, %s36
      %p45 = scmp.eq.s32.totalorder %s30, 0
      %p46 = por %p44, %p45
      %p47 = scmp.ne.s32.totalorder %s35, %s36
      %p48 = scmp.eq.s32.totalorder %s31, 1
      %p49 = por %p47, %p48
      %p51 = scmp.ne.s32.totalorder %s36, %s50
      %p52 = scmp.eq.s32.totalorder %s31, 0
      %p53 = por %p51, %p52
      %s54 = ssub.s32 %s25, %s32
      %p55 = scmp.eq.s32.totalorder %s54, 0
      %s57 = sadd.s32 %s56, 1
      %s58 = scalar_select %p55, %s56, %s57
      %p61 = pneg %p55
      %p62 = scmp.eq.s32.totalorder %s25, 1
      %p63 = por %p61, %p62
      %p64 = scmp.ne.s32.totalorder %s56, %s59
      %p65 = scmp.eq.s32.totalorder %s25, 0
      %p66 = por %p64, %p65
      %p67 = scmp.ne.s32.totalorder %s56, %s59
      %p68 = scmp.eq.s32.totalorder %s30, 1
      %p69 = por %p67, %p68
      %p70 = scmp.ne.s32.totalorder %s59, %s60
      %p71 = scmp.eq.s32.totalorder %s30, 0
      %p72 = por %p70, %p71
      %p73 = scmp.ne.s32.totalorder %s59, %s60
      %p74 = scmp.eq.s32.totalorder %s31, 1
      %p75 = por %p73, %p74
      %p77 = scmp.ne.s32.totalorder %s60, %s76
      %p78 = scmp.eq.s32.totalorder %s31, 0
      %p79 = por %p77, %p78
      %s80 = ssub.s32 %s25, %s32
      %p81 = scmp.eq.s32.totalorder %s80, 0
      %s83 = sadd.s32 %s82, 1
      %s84 = scalar_select %p81, %s82, %s83
      %p87 = pneg %p81
      %p88 = scmp.eq.s32.totalorder %s25, 1
      %p89 = por %p87, %p88
      %p90 = scmp.ne.s32.totalorder %s82, %s85
      %p91 = scmp.eq.s32.totalorder %s25, 0
      %p92 = por %p90, %p91
      %p93 = scmp.ne.s32.totalorder %s82, %s85
      %p94 = scmp.eq.s32.totalorder %s30, 1
      %p95 = por %p93, %p94
      %p96 = scmp.ne.s32.totalorder %s85, %s86
      %p97 = scmp.eq.s32.totalorder %s30, 0
      %p98 = por %p96, %p97
      %p99 = scmp.ne.s32.totalorder %s85, %s86
      %p100 = scmp.eq.s32.totalorder %s31, 1
      %p101 = por %p99, %p100
      %p103 = scmp.ne.s32.totalorder %s86, %s102
      %p104 = scmp.eq.s32.totalorder %s31, 0
      %p105 = por %p103, %p104
      %s107 = sadd.s32 %s106, 1
      %p110 = scmp.eq.s32.totalorder %s25, 1
      %p111 = scmp.ne.s32.totalorder %s106, %s108
      %p112 = scmp.eq.s32.totalorder %s25, 0
      %p113 = por %p111, %p112
      %p114 = scmp.ne.s32.totalorder %s106, %s108
      %p115 = scmp.eq.s32.totalorder %s30, 1
      %p116 = por %p114, %p115
      %p117 = scmp.ne.s32.totalorder %s108, %s109
      %p118 = scmp.eq.s32.totalorder %s30, 0
      %p119 = por %p117, %p118
      %p120 = scmp.ne.s32.totalorder %s108, %s109
      %p121 = scmp.eq.s32.totalorder %s31, 1
      %p122 = por %p120, %p121
      %p124 = scmp.ne.s32.totalorder %s109, %s123
      %p125 = scmp.eq.s32.totalorder %s31, 0
      %p126 = por %p124, %p125
      %s127 = ssub.s32 %s25, %s32
      %p128 = scmp.eq.s32.totalorder %s127, 0
      %s130 = sadd.s32 %s129, 1
      %s131 = scalar_select %p128, %s129, %s130
      %p134 = pneg %p128
      %p135 = scmp.eq.s32.totalorder %s25, 1
      %p136 = por %p134, %p135
      %p137 = scmp.ne.s32.totalorder %s129, %s132
      %p138 = scmp.eq.s32.totalorder %s25, 0
      %p139 = por %p137, %p138
      %p140 = scmp.ne.s32.totalorder %s129, %s132
      %p141 = scmp.eq.s32.totalorder %s30, 1
      %p142 = por %p140, %p141
      %p143 = scmp.ne.s32.totalorder %s132, %s133
      %p144 = scmp.eq.s32.totalorder %s30, 0
      %p145 = por %p143, %p144
      %p146 = scmp.ne.s32.totalorder %s132, %s133
      %p147 = scmp.eq.s32.totalorder %s31, 1
      %p148 = por %p146, %p147
      %p150 = scmp.ne.s32.totalorder %s133, %s149
      %p151 = scmp.eq.s32.totalorder %s31, 0
      %p152 = por %p150, %p151
      %s153 = ssub.s32 %s25, %s32
      %p154 = scmp.eq.s32.totalorder %s153, 0
      %s156 = sadd.s32 %s155, 1
      %s157 = scalar_select %p154, %s155, %s156
      %p160 = pneg %p154
      %p161 = scmp.eq.s32.totalorder %s25, 1
      %p162 = por %p160, %p161
      %p163 = scmp.ne.s32.totalorder %s155, %s158
      %p164 = scmp.eq.s32.totalorder %s25, 0
      %p165 = por %p163, %p164
      %p166 = scmp.ne.s32.totalorder %s155, %s158
      %p167 = scmp.eq.s32.totalorder %s30, 1
      %p168 = por %p166, %p167
      %p169 = scmp.ne.s32.totalorder %s158, %s159
      %p170 = scmp.eq.s32.totalorder %s30, 0
      %p171 = por %p169, %p170
      %p172 = scmp.ne.s32.totalorder %s158, %s159
      %p173 = scmp.eq.s32.totalorder %s31, 1
      %p174 = por %p172, %p173
      %p176 = scmp.ne.s32.totalorder %s159, %s175
      %p177 = scmp.eq.s32.totalorder %s31, 0
      %p178 = por %p176, %p177
      %p179 = scmp.le.s32.totalorder 1, %s25
      %p180 = scmp.lt.s32.totalorder %s25, 3
      %p181 = pnand %p179, %p180
      %p182 = pneg %p181
      // Predicated region
      $region9: #{tpu_custom_call.1} parent=5 // pred_check
        _
      $region10: #{tpu_custom_call.1} parent=5 // pred_check_branch
        %184 = sbr.rel (%p181) target = $region12
      $region11: #{tpu_custom_call.1} parent=5 // pred_region
        %s185 = ssub.s32 %s25, 1
        // Predicated region
        $region13: #{tpu_custom_call.1} parent=11 // pred_check
          %p186 = pneg %p46
        $region14: #{tpu_custom_call.1} parent=11 // pred_check_branch
          %188 = sbr.rel (%p186) target = $region16
        $region15: #{tpu_custom_call.1} parent=11 // pred_region
          _
        $region16: #{tpu_custom_call.1} parent=11 // pred_fallthru
          _
        // Predicated region
        $region17: #{tpu_custom_call.1} parent=11 // pred_check
          %p189 = pneg %p119
        $region18: #{tpu_custom_call.1} parent=11 // pred_check_branch
          %191 = sbr.rel (%p189) target = $region20
        $region19: #{tpu_custom_call.1} parent=11 // pred_region
          _
        $region20: #{tpu_custom_call.1} parent=11 // pred_fallthru
          _
      $region12: #{tpu_custom_call.1} parent=5 // pred_fallthru
        _
      %p192 = scmp.lt.s32.totalorder %s25, 2
      // Predicated region
      $region21: #{tpu_custom_call.1} parent=5 // pred_check
        %p193 = pneg %p192
      $region22: #{tpu_custom_call.1} parent=5 // pred_check_branch
        %195 = sbr.rel (%p193) target = $region24
      $region23: #{tpu_custom_call.1} parent=5 // pred_region
        // Predicated region
        $region25: #{tpu_custom_call.1} parent=23 // pred_check
          %p196 = pneg %p66
        $region26: #{tpu_custom_call.1} parent=23 // pred_check_branch
          %198 = sbr.rel (%p196) target = $region28
        $region27: #{tpu_custom_call.1} parent=23 // pred_region
          %s199 = sand.u32 %s56, 1
          %s200 = scalar_lea.sflag [#allocation4], %s199
          %s201 = sand.u32 %s56, 1
          %s202 = smul.addr %s201, 64
          %s203 = scalar_lea.vmem [#allocation3], %s202
          %s205 = ssub.s32 1024, 1024
          %206 = vsyncadd %s200, %s205
          %s207 = smul.addr %s25, 128
          %s208 = scalar_lea.hbm %s1, %s207
          %s209 = sshll.u32 %s203, 4
          %s210 = int_to_ptr.vmem [resolvable:$true] %s209
          %215 = dma.hbm_to_vmem [thread:$0]  %s208, 1024, %s210, %s200, 256, 128, 8
        $region28: #{tpu_custom_call.1} parent=23 // pred_fallthru
          _
        // Predicated region
        $region29: #{tpu_custom_call.1} parent=23 // pred_check
          %p216 = pneg %p92
        $region30: #{tpu_custom_call.1} parent=23 // pred_check_branch
          %218 = sbr.rel (%p216) target = $region32
        $region31: #{tpu_custom_call.1} parent=23 // pred_region
          %s219 = sand.u32 %s82, 1
          %s220 = scalar_lea.sflag [#allocation7], %s219
          %s221 = sand.u32 %s82, 1
          %s222 = smul.addr %s221, 16
          %s223 = scalar_lea.vmem [#allocation6], %s222
          %s225 = ssub.s32 256, 256
          %226 = vsyncadd %s220, %s225
          %s227 = smul.addr %s25, 128
          %s228 = scalar_lea.hbm %s2, %s227
          %s229 = sshll.u32 %s223, 4
          %s230 = int_to_ptr.vmem [resolvable:$true] %s229
          %235 = dma.hbm_to_vmem [thread:$0]  %s228, 256, %s230, %s220, 256, 128, 8
        $region32: #{tpu_custom_call.1} parent=23 // pred_fallthru
          _
      $region24: #{tpu_custom_call.1} parent=5 // pred_fallthru
        _
      %p236 = scmp.le.s32.totalorder 1, %s25
      %p237 = scmp.lt.s32.totalorder %s25, 3
      %p238 = pnand %p236, %p237
      %p239 = pneg %p238
      // Predicated region
      $region33: #{tpu_custom_call.1} parent=5 // pred_check
        _
      $region34: #{tpu_custom_call.1} parent=5 // pred_check_branch
        %241 = sbr.rel (%p238) target = $region36
      $region35: #{tpu_custom_call.1} parent=5 // pred_region
        %s242 = ssub.s32 %s25, 1
        %s243 = sand.u32 %s59, 1
        %s244 = scalar_lea.sflag [#allocation4], %s243
        %s245 = sand.u32 %s59, 1
        %s246 = smul.addr %s245, 64
        %s247 = scalar_lea.vmem [#allocation3], %s246
        // Predicated region
        $region37: #{tpu_custom_call.1} parent=35 // pred_check
          %p248 = pneg %p72
        $region38: #{tpu_custom_call.1} parent=35 // pred_check_branch
          %250 = sbr.rel (%p248) target = $region40
        $region39: #{tpu_custom_call.1} parent=35 // pred_region
          %251 = dma.done %s244, 1024
        $region40: #{tpu_custom_call.1} parent=35 // pred_fallthru
          _
        %s252 = sand.u32 %s85, 1
        %s253 = scalar_lea.sflag [#allocation7], %s252
        %s254 = sand.u32 %s85, 1
        %s255 = smul.addr %s254, 16
        %s256 = scalar_lea.vmem [#allocation6], %s255
        // Predicated region
        $region41: #{tpu_custom_call.1} parent=35 // pred_check
          %p257 = pneg %p98
        $region42: #{tpu_custom_call.1} parent=35 // pred_check_branch
          %259 = sbr.rel (%p257) target = $region44
        $region43: #{tpu_custom_call.1} parent=35 // pred_region
          %260 = dma.done %s253, 256
        $region44: #{tpu_custom_call.1} parent=35 // pred_fallthru
          _
        %p261 = pneg %p46
        %p262 = pneg %p43
        %s263 = sand.u32 %s59, 1
        %s264 = scalar_lea.sflag [#allocation4], %s263
        %s265 = sand.u32 %s59, 1
        %s266 = smul.addr %s265, 64
        %s267 = scalar_lea.vmem [#allocation3], %s266
        %p268 = pneg %p72
        %p269 = pneg %p69
        %s270 = sand.u32 %s85, 1
        %s271 = scalar_lea.sflag [#allocation7], %s270
        %s272 = sand.u32 %s85, 1
        %s273 = smul.addr %s272, 16
        %s274 = scalar_lea.vmem [#allocation6], %s273
        %p275 = pneg %p98
        %p276 = pneg %p95
        %p277 = pneg %p119
        %p278 = pneg %p116
        %p279 = pneg %p145
        %p280 = pneg %p142
        %s281 = sand.u32 %s132, 1
        %s282 = scalar_lea.sflag [#allocation5], %s281
        %s283 = sand.u32 %s132, 1
        %s284 = smul.addr %s283, 2
        %s285 = scalar_lea.vmem [#allocation8], %s284
        %p286 = pneg %p171
        %p287 = pneg %p168
        %s288 = sand.u32 %s158, 1
        %s289 = scalar_lea.sflag [#allocation10], %s288
        %s290 = sand.u32 %s158, 1
        %s291 = scalar_lea.vmem [#allocation9], %s290
        %s292 = sld [smem:[#allocation2]]
        %v293 = vld [vmem:[%s256] sm:$0xff]
        %v294 = vld [vmem:[%s256 + $0x8] sm:$0xff]
        %v295 = vld [vmem:[%s247] sm:$0xff]
        %v296 = vld [vmem:[%s247 + $0x8] sm:$0xff]
        %v297 = vld [vmem:[%s247 + $0x10] sm:$0xff]
        %v298 = vld [vmem:[%s247 + $0x18] sm:$0xff]
        %v299 = vld [vmem:[%s247 + $0x20] sm:$0xff]
        %v300 = vld [vmem:[%s247 + $0x28] sm:$0xff]
        %v301 = vld [vmem:[%s247 + $0x30] sm:$0xff]
        %v302 = vld [vmem:[%s247 + $0x38] sm:$0xff]
        %v303 = vld [vmem:[%s3] sm:$0x1]
        %v305 = vlaneseq
        %v306 = vshrl.u32 %v305, 7
        %v307 = vsub.s32 0, %v306
        %v308 = vrot.slane %v303, %v307
        %v310 = vsub.f32 %v293, %v308
        %v311 = vsub.f32 %v294, %v308
        %v312 = vstv %s292
        %v313 = vmul.f32 %v310, %v312
        %v314 = vmul.f32 %v311, %v312
        %315 = vmax.xlane.f32.xlu0 %v313
        %v316 = vpop.xlane.xlu0 %315
        %317 = vmax.xlane.f32.xlu0 %v314
        %v318 = vpop.xlane.xlu0 %317
        %v319 = vsub.f32 %v313, %v316
        %v320 = vsub.f32 %v314, %v318
        %v321 = vmul.f32 %v319, 1.442695
        %v322 = vpow.pop %v321
        %v323 = vmul.f32 %v320, 1.442695
        %v324 = vpow.pop %v323
        %325 = vadd.xlane.f32.xlu0 %v322
        %v326 = vpop.xlane.xlu0 %325
        %327 = vadd.xlane.f32.xlu0 %v324
        %v328 = vpop.xlane.xlu0 %327
        %v329 = vrcp.pop %v326
        %v330 = vrcp.pop %v328
        %v331 = vmul.f32 %v322, %v329
        %v332 = vmul.f32 %v324, %v330
        %333 = vadd.xlane.f32.xlu0 %v331
        %v334 = vpop.xlane.xlu0 %333
        %335 = vadd.xlane.f32.xlu0 %v332
        %v336 = vpop.xlane.xlu0 %335
        %v337 = vmul.f32 %v295, 10.0
        %v338 = vmul.f32 %v296, 10.0
        %v339 = vmul.f32 %v297, 10.0
        %v340 = vmul.f32 %v298, 10.0
        %v341 = vmul.f32 %v299, 10.0
        %v342 = vmul.f32 %v300, 10.0
        %v343 = vmul.f32 %v301, 10.0
        %v344 = vmul.f32 %v302, 10.0
        %345 = vmax.xlane.f32.xlu0 %v337
        %v346 = vpop.xlane.xlu0 %345
        %347 = vmax.xlane.f32.xlu0 %v338
        %v348 = vpop.xlane.xlu0 %347
        %349 = vmax.xlane.f32.xlu0 %v339
        %v350 = vpop.xlane.xlu0 %349
        %351 = vmax.xlane.f32.xlu0 %v340
        %v352 = vpop.xlane.xlu0 %351
        %353 = vmax.xlane.f32.xlu0 %v341
        %v354 = vpop.xlane.xlu0 %353
        %355 = vmax.xlane.f32.xlu0 %v342
        %v356 = vpop.xlane.xlu0 %355
        %357 = vmax.xlane.f32.xlu0 %v343
        %v358 = vpop.xlane.xlu0 %357
        %359 = vmax.xlane.f32.xlu0 %v344
        %v360 = vpop.xlane.xlu0 %359
        %v361 = vsub.f32 %v337, %v346
        %v362 = vsub.f32 %v338, %v348
        %v363 = vsub.f32 %v339, %v350
        %v364 = vsub.f32 %v340, %v352
        %v365 = vsub.f32 %v341, %v354
        %v366 = vsub.f32 %v342, %v356
        %v367 = vsub.f32 %v343, %v358
        %v368 = vsub.f32 %v344, %v360
        %v369 = vmul.f32 %v361, 1.442695
        %v370 = vpow.pop %v369
        %v371 = vmul.f32 %v362, 1.442695
        %v372 = vpow.pop %v371
        %v373 = vmul.f32 %v363, 1.442695
        %v374 = vpow.pop %v373
        %v375 = vmul.f32 %v364, 1.442695
        %v376 = vpow.pop %v375
        %v377 = vmul.f32 %v365, 1.442695
        %v378 = vpow.pop %v377
        %v379 = vmul.f32 %v366, 1.442695
        %v380 = vpow.pop %v379
        %v381 = vmul.f32 %v367, 1.442695
        %v382 = vpow.pop %v381
        %v383 = vmul.f32 %v368, 1.442695
        %v384 = vpow.pop %v383
        %385 = vadd.xlane.f32.xlu0 %v370
        %v386 = vpop.xlane.xlu0 %385
        %387 = vadd.xlane.f32.xlu0 %v372
        %v388 = vpop.xlane.xlu0 %387
        %389 = vadd.xlane.f32.xlu0 %v374
        %v390 = vpop.xlane.xlu0 %389
        %391 = vadd.xlane.f32.xlu0 %v376
        %v392 = vpop.xlane.xlu0 %391
        %393 = vadd.xlane.f32.xlu0 %v378
        %v394 = vpop.xlane.xlu0 %393
        %395 = vadd.xlane.f32.xlu0 %v380
        %v396 = vpop.xlane.xlu0 %395
        %397 = vadd.xlane.f32.xlu0 %v382
        %v398 = vpop.xlane.xlu0 %397
        %399 = vadd.xlane.f32.xlu0 %v384
        %v400 = vpop.xlane.xlu0 %399
        %v401 = vlog2.pop %v386
        %v402 = vmul.f32 %v401, 0.6931472
        %v403 = vlog2.pop %v388
        %v404 = vmul.f32 %v403, 0.6931472
        %v405 = vlog2.pop %v390
        %v406 = vmul.f32 %v405, 0.6931472
        %v407 = vlog2.pop %v392
        %v408 = vmul.f32 %v407, 0.6931472
        %v409 = vlog2.pop %v394
        %v410 = vmul.f32 %v409, 0.6931472
        %v411 = vlog2.pop %v396
        %v412 = vmul.f32 %v411, 0.6931472
        %v413 = vlog2.pop %v398
        %v414 = vmul.f32 %v413, 0.6931472
        %v415 = vlog2.pop %v400
        %v416 = vmul.f32 %v415, 0.6931472
        %v417 = vadd.f32 %v346, %v402
        %v418 = vadd.f32 %v348, %v404
        %v419 = vadd.f32 %v350, %v406
        %v420 = vadd.f32 %v352, %v408
        %v421 = vadd.f32 %v354, %v410
        %v422 = vadd.f32 %v356, %v412
        %v423 = vadd.f32 %v358, %v414
        %v424 = vadd.f32 %v360, %v416
        %v425 = vmul.f32 %v331, %v337
        %v426 = vmul.f32 %v331, %v338
        %v427 = vmul.f32 %v331, %v339
        %v428 = vmul.f32 %v331, %v340
        %v429 = vmul.f32 %v331, %v341
        %v430 = vmul.f32 %v331, %v342
        %v431 = vmul.f32 %v331, %v343
        %v432 = vmul.f32 %v331, %v344
        %433 = vadd.xlane.f32.xlu0 %v425
        %v434 = vpop.xlane.xlu0 %433
        %435 = vadd.xlane.f32.xlu0 %v426
        %v436 = vpop.xlane.xlu0 %435
        %437 = vadd.xlane.f32.xlu0 %v427
        %v438 = vpop.xlane.xlu0 %437
        %439 = vadd.xlane.f32.xlu0 %v428
        %v440 = vpop.xlane.xlu0 %439
        %441 = vadd.xlane.f32.xlu0 %v429
        %v442 = vpop.xlane.xlu0 %441
        %443 = vadd.xlane.f32.xlu0 %v430
        %v444 = vpop.xlane.xlu0 %443
        %445 = vadd.xlane.f32.xlu0 %v431
        %v446 = vpop.xlane.xlu0 %445
        %447 = vadd.xlane.f32.xlu0 %v432
        %v448 = vpop.xlane.xlu0 %447
        %v457 = vlaneseq
        %v458 = vand.u32 %v457, 127
        %v459 = vlaneseq
        %v460 = vshrl.u32 %v459, 7
        %v461 = vsub.s32 %v458, %v460
        %v462 = vrot.slane %v434, %v461
        %v463 = vlaneseq
        %v464 = vshrl.u32 %v463, 7
        %v465 = vsub.s32 %v458, %v464
        %v466 = vrot.slane %v436, %v465
        %v467 = vlaneseq
        %v468 = vshrl.u32 %v467, 7
        %v469 = vsub.s32 %v458, %v468
        %v470 = vrot.slane %v438, %v469
        %v471 = vlaneseq
        %v472 = vshrl.u32 %v471, 7
        %v473 = vsub.s32 %v458, %v472
        %v474 = vrot.slane %v440, %v473
        %v475 = vlaneseq
        %v476 = vshrl.u32 %v475, 7
        %v477 = vsub.s32 %v458, %v476
        %v478 = vrot.slane %v442, %v477
        %v479 = vlaneseq
        %v480 = vshrl.u32 %v479, 7
        %v481 = vsub.s32 %v458, %v480
        %v482 = vrot.slane %v444, %v481
        %v483 = vlaneseq
        %v484 = vshrl.u32 %v483, 7
        %v485 = vsub.s32 %v458, %v484
        %v486 = vrot.slane %v446, %v485
        %v487 = vlaneseq
        %v488 = vshrl.u32 %v487, 7
        %v489 = vsub.s32 %v458, %v488
        %v490 = vrot.slane %v448, %v489
        %vm491 = vcmask 1041409
        %v492 = vsel %vm491, %v466, %v462
        %vm493 = vcmask 1042434
        %v494 = vsel %vm493, %v470, %v492
        %vm495 = vcmask 1043459
        %v496 = vsel %vm495, %v474, %v494
        %vm497 = vcmask 1044484
        %v498 = vsel %vm497, %v478, %v496
        %vm499 = vcmask 1045509
        %v500 = vsel %vm499, %v482, %v498
        %vm501 = vcmask 1046534
        %v502 = vsel %vm501, %v486, %v500
        %vm503 = vcmask 1047559
        %v504 = vsel %vm503, %v490, %v502
        %vm506 = vcmask 64512
        %v507 = vsel %vm506, %v504, 0.0
        %508 = vadd.xlane.f32.xlu0 %v507
        %v509 = vpop.xlane.xlu0 %508
        %v510 = vmul.f32 %v332, %v337
        %v511 = vmul.f32 %v332, %v338
        %v512 = vmul.f32 %v332, %v339
        %v513 = vmul.f32 %v332, %v340
        %v514 = vmul.f32 %v332, %v341
        %v515 = vmul.f32 %v332, %v342
        %v516 = vmul.f32 %v332, %v343
        %v517 = vmul.f32 %v332, %v344
        %518 = vadd.xlane.f32.xlu0 %v510
        %v519 = vpop.xlane.xlu0 %518
        %520 = vadd.xlane.f32.xlu0 %v511
        %v521 = vpop.xlane.xlu0 %520
        %522 = vadd.xlane.f32.xlu0 %v512
        %v523 = vpop.xlane.xlu0 %522
        %524 = vadd.xlane.f32.xlu0 %v513
        %v525 = vpop.xlane.xlu0 %524
        %526 = vadd.xlane.f32.xlu0 %v514
        %v527 = vpop.xlane.xlu0 %526
        %528 = vadd.xlane.f32.xlu0 %v515
        %v529 = vpop.xlane.xlu0 %528
        %530 = vadd.xlane.f32.xlu0 %v516
        %v531 = vpop.xlane.xlu0 %530
        %532 = vadd.xlane.f32.xlu0 %v517
        %v533 = vpop.xlane.xlu0 %532
        %v542 = vlaneseq
        %v543 = vshrl.u32 %v542, 7
        %v544 = vsub.s32 %v458, %v543
        %v545 = vrot.slane %v519, %v544
        %v546 = vlaneseq
        %v547 = vshrl.u32 %v546, 7
        %v548 = vsub.s32 %v458, %v547
        %v549 = vrot.slane %v521, %v548
        %v550 = vlaneseq
        %v551 = vshrl.u32 %v550, 7
        %v552 = vsub.s32 %v458, %v551
        %v553 = vrot.slane %v523, %v552
        %v554 = vlaneseq
        %v555 = vshrl.u32 %v554, 7
        %v556 = vsub.s32 %v458, %v555
        %v557 = vrot.slane %v525, %v556
        %v558 = vlaneseq
        %v559 = vshrl.u32 %v558, 7
        %v560 = vsub.s32 %v458, %v559
        %v561 = vrot.slane %v527, %v560
        %v562 = vlaneseq
        %v563 = vshrl.u32 %v562, 7
        %v564 = vsub.s32 %v458, %v563
        %v565 = vrot.slane %v529, %v564
        %v566 = vlaneseq
        %v567 = vshrl.u32 %v566, 7
        %v568 = vsub.s32 %v458, %v567
        %v569 = vrot.slane %v531, %v568
        %v570 = vlaneseq
        %v571 = vshrl.u32 %v570, 7
        %v572 = vsub.s32 %v458, %v571
        %v573 = vrot.slane %v533, %v572
        %v574 = vsel %vm491, %v549, %v545
        %v575 = vsel %vm493, %v553, %v574
        %v576 = vsel %vm495, %v557, %v575
        %v577 = vsel %vm497, %v561, %v576
        %v578 = vsel %vm499, %v565, %v577
        %v579 = vsel %vm501, %v569, %v578
        %v580 = vsel %vm503, %v573, %v579
        %v582 = vsel %vm506, %v580, 0.0
        %583 = vadd.xlane.f32.xlu0 %v582
        %v584 = vpop.xlane.xlu0 %583
        %v586 = vlaneseq
        %v587 = vshrl.u32 %v586, 7
        %v588 = vsub.s32 %v458, %v587
        %v589 = vrot.slane %v509, %v588
        %v592 = vlaneseq
        %v593 = vshrl.u32 %v592, 7
        %v594 = vsub.s32 %v458, %v593
        %v595 = vrot.slane %v584, %v594
        %vm597 = vcmask 1040384
        %v598 = vsel %vm597, %v589, %v595
        %v599 = vmul.f32 %v334, %v417
        %v600 = vmul.f32 %v334, %v418
        %v601 = vmul.f32 %v334, %v419
        %v602 = vmul.f32 %v334, %v420
        %v603 = vmul.f32 %v334, %v421
        %v604 = vmul.f32 %v334, %v422
        %v605 = vmul.f32 %v334, %v423
        %v606 = vmul.f32 %v334, %v424
        %v607 = vmul.f32 %v336, %v417
        %v608 = vmul.f32 %v336, %v418
        %v609 = vmul.f32 %v336, %v419
        %v610 = vmul.f32 %v336, %v420
        %v611 = vmul.f32 %v336, %v421
        %v612 = vmul.f32 %v336, %v422
        %v613 = vmul.f32 %v336, %v423
        %v614 = vmul.f32 %v336, %v424
        %v631 = vlaneseq
        %v632 = vshrl.u32 %v631, 7
        %v633 = vsub.s32 %v458, %v632
        %v634 = vrot.slane %v599, %v633
        %v635 = vlaneseq
        %v636 = vshrl.u32 %v635, 7
        %v637 = vsub.s32 %v458, %v636
        %v638 = vrot.slane %v600, %v637
        %v639 = vlaneseq
        %v640 = vshrl.u32 %v639, 7
        %v641 = vsub.s32 %v458, %v640
        %v642 = vrot.slane %v601, %v641
        %v643 = vlaneseq
        %v644 = vshrl.u32 %v643, 7
        %v645 = vsub.s32 %v458, %v644
        %v646 = vrot.slane %v602, %v645
        %v647 = vlaneseq
        %v648 = vshrl.u32 %v647, 7
        %v649 = vsub.s32 %v458, %v648
        %v650 = vrot.slane %v603, %v649
        %v651 = vlaneseq
        %v652 = vshrl.u32 %v651, 7
        %v653 = vsub.s32 %v458, %v652
        %v654 = vrot.slane %v604, %v653
        %v655 = vlaneseq
        %v656 = vshrl.u32 %v655, 7
        %v657 = vsub.s32 %v458, %v656
        %v658 = vrot.slane %v605, %v657
        %v659 = vlaneseq
        %v660 = vshrl.u32 %v659, 7
        %v661 = vsub.s32 %v458, %v660
        %v662 = vrot.slane %v606, %v661
        %v663 = vlaneseq
        %v664 = vshrl.u32 %v663, 7
        %v665 = vsub.s32 %v458, %v664
        %v666 = vrot.slane %v607, %v665
        %v667 = vlaneseq
        %v668 = vshrl.u32 %v667, 7
        %v669 = vsub.s32 %v458, %v668
        %v670 = vrot.slane %v608, %v669
        %v671 = vlaneseq
        %v672 = vshrl.u32 %v671, 7
        %v673 = vsub.s32 %v458, %v672
        %v674 = vrot.slane %v609, %v673
        %v675 = vlaneseq
        %v676 = vshrl.u32 %v675, 7
        %v677 = vsub.s32 %v458, %v676
        %v678 = vrot.slane %v610, %v677
        %v679 = vlaneseq
        %v680 = vshrl.u32 %v679, 7
        %v681 = vsub.s32 %v458, %v680
        %v682 = vrot.slane %v611, %v681
        %v683 = vlaneseq
        %v684 = vshrl.u32 %v683, 7
        %v685 = vsub.s32 %v458, %v684
        %v686 = vrot.slane %v612, %v685
        %v687 = vlaneseq
        %v688 = vshrl.u32 %v687, 7
        %v689 = vsub.s32 %v458, %v688
        %v690 = vrot.slane %v613, %v689
        %v691 = vlaneseq
        %v692 = vshrl.u32 %v691, 7
        %v693 = vsub.s32 %v458, %v692
        %v694 = vrot.slane %v614, %v693
        %v695 = vsel %vm491, %v638, %v634
        %v696 = vsel %vm493, %v642, %v695
        %v697 = vsel %vm495, %v646, %v696
        %v698 = vsel %vm497, %v650, %v697
        %v699 = vsel %vm499, %v654, %v698
        %v700 = vsel %vm501, %v658, %v699
        %v701 = vsel %vm503, %v662, %v700
        %v702 = vsel %vm491, %v670, %v666
        %v703 = vsel %vm493, %v674, %v702
        %v704 = vsel %vm495, %v678, %v703
        %v705 = vsel %vm497, %v682, %v704
        %v706 = vsel %vm499, %v686, %v705
        %v707 = vsel %vm501, %v690, %v706
        %v708 = vsel %vm503, %v694, %v707
        %v711 = vsel %vm506, %v701, 0.0
        %712 = vadd.xlane.f32.xlu0 %v711
        %v713 = vpop.xlane.xlu0 %712
        %v714 = vsel %vm506, %v708, 0.0
        %715 = vadd.xlane.f32.xlu0 %v714
        %v716 = vpop.xlane.xlu0 %715
        %v719 = vlaneseq
        %v720 = vshrl.u32 %v719, 7
        %v721 = vsub.s32 %v458, %v720
        %v722 = vrot.slane %v713, %v721
        %v723 = vlaneseq
        %v724 = vshrl.u32 %v723, 7
        %v725 = vsub.s32 %v458, %v724
        %v726 = vrot.slane %v716, %v725
        %v727 = vsel %vm491, %v726, %v722
        %v729 = vsub.f32 %v598, %v727
        %v730 = vsub.f32 0.0, %v729
        %v731 = vmul.f32 %v730, 0.0625
        %vm732 = vcmask 58368
        %733 = vst.msk [vmem:[%s285] sm:$0x3] %vm732, %v731
        %v734 = vadd.f32 %v293, %v294
        %v735 = vrot.slane %v734, 4
        %v736 = vadd.f32 %v734, %v735
        %v737 = vrot.slane %v736, 2
        %v738 = vadd.f32 %v736, %v737
        %v739 = vrot.slane %v738, 1
        %v740 = vadd.f32 %v738, %v739
        %741 = vst [vmem:[%s291] sm:$0x1] %v740
        %s742 = sand.u32 %s132, 1
        %s743 = scalar_lea.sflag [#allocation5], %s742
        %s744 = sand.u32 %s132, 1
        %s745 = smul.addr %s744, 2
        %s746 = scalar_lea.vmem [#allocation8], %s745
        %s747 = sand.u32 %s158, 1
        %s748 = scalar_lea.sflag [#allocation10], %s747
        %s749 = sand.u32 %s158, 1
        %s750 = scalar_lea.vmem [#allocation9], %s749
        // Predicated region
        $region45: #{tpu_custom_call.1} parent=35 // pred_check
          %p751 = pneg %p142
        $region46: #{tpu_custom_call.1} parent=35 // pred_check_branch
          %753 = sbr.rel (%p751) target = $region48
        $region47: #{tpu_custom_call.1} parent=35 // pred_region
          %s755 = ssub.s32 32, 32
          %756 = vsyncadd %s743, %s755
          %s757 = smul.addr %s30, 32
          %s758 = scalar_lea.hbm %s4, %s757
          %s760 = sshll.u32 %s746, 4
          %s761 = int_to_ptr.vmem [resolvable:$true] %s760
          %763 = dma.vmem_to_hbm [thread:$0]  %s761, 32, %s758, %s743
        $region48: #{tpu_custom_call.1} parent=35 // pred_fallthru
          _
        // Predicated region
        $region49: #{tpu_custom_call.1} parent=35 // pred_check
          %p764 = pneg %p168
        $region50: #{tpu_custom_call.1} parent=35 // pred_check_branch
          %766 = sbr.rel (%p764) target = $region52
        $region51: #{tpu_custom_call.1} parent=35 // pred_region
          %s768 = ssub.s32 16, 16
          %769 = vsyncadd %s748, %s768
          %s770 = smul.addr %s30, 16
          %s771 = scalar_lea.hbm %s5, %s770
          %s773 = sshll.u32 %s750, 4
          %s774 = int_to_ptr.vmem [resolvable:$true] %s773
          %776 = dma.vmem_to_hbm [thread:$0]  %s774, 16, %s771, %s748
        $region52: #{tpu_custom_call.1} parent=35 // pred_fallthru
          _
      $region36: #{tpu_custom_call.1} parent=5 // pred_fallthru
        _
      %p777 = scmp.le.s32.totalorder 2, %s25
      // Predicated region
      $region53: #{tpu_custom_call.1} parent=5 // pred_check
        %p778 = pneg %p777
      $region54: #{tpu_custom_call.1} parent=5 // pred_check_branch
        %780 = sbr.rel (%p778) target = $region56
      $region55: #{tpu_custom_call.1} parent=5 // pred_region
        %s781 = ssub.s32 %s25, 2
        // Predicated region
        $region57: #{tpu_custom_call.1} parent=55 // pred_check
          %p782 = pneg %p148
        $region58: #{tpu_custom_call.1} parent=55 // pred_check_branch
          %784 = sbr.rel (%p782) target = $region60
        $region59: #{tpu_custom_call.1} parent=55 // pred_region
          %s785 = sand.u32 %s133, 1
          %s786 = scalar_lea.sflag [#allocation5], %s785
          %s787 = sand.u32 %s133, 1
          %s788 = smul.addr %s787, 2
          %s789 = scalar_lea.vmem [#allocation8], %s788
          %790 = dma.done %s786, 32
        $region60: #{tpu_custom_call.1} parent=55 // pred_fallthru
          _
        // Predicated region
        $region61: #{tpu_custom_call.1} parent=55 // pred_check
          %p791 = pneg %p174
        $region62: #{tpu_custom_call.1} parent=55 // pred_check_branch
          %793 = sbr.rel (%p791) target = $region64
        $region63: #{tpu_custom_call.1} parent=55 // pred_region
          %s794 = sand.u32 %s159, 1
          %s795 = scalar_lea.sflag [#allocation10], %s794
          %s796 = sand.u32 %s159, 1
          %s797 = scalar_lea.vmem [#allocation9], %s796
          %798 = dma.done %s795, 16
        $region64: #{tpu_custom_call.1} parent=55 // pred_fallthru
          _
      $region56: #{tpu_custom_call.1} parent=5 // pred_fallthru
        _
    $region6: #{tpu_custom_call.1} parent=1 // loop_footer
      %s29 = sadd.s32 1, %s25
    $region7: #{tpu_custom_call.1} parent=1 // loop_footer_branch
      %24 = sbr.rel target = $region3
    $region8: #{tpu_custom_call.1} parent=1 // loop_exit
      _
    %799 = vsyncpa [#allocation4], 1
    %s800 = scalar_lea.sflag [#allocation4], 1
    %801 = vsyncpa %s800, 1
    %802 = vsyncpa [#allocation7], 1
    %s803 = scalar_lea.sflag [#allocation7], 1
    %804 = vsyncpa %s803, 1
    %805 = vsyncpa [#allocation5], 1
    %s806 = scalar_lea.sflag [#allocation5], 1
    %807 = vsyncpa %s806, 1
    %808 = vsyncpa [#allocation10], 1
    %s809 = scalar_lea.sflag [#allocation10], 1
    %810 = vsyncpa %s809, 1

</llo_original>
